<compile_context>
chip_gen: v6e
topology: v6e:2x2x1
jax: 0.10.0
libtpu: 0.0.40
codegen_flags: <defaults>
</compile_context>

<pallas_src>
import jax
import jax.numpy as jnp
from jax.experimental import pallas as pl
from jax.experimental.pallas import tpu as pltpu

# ---------------------------------------------------------------------------
# Problem sizes (small, consistent with the forward semantics)
# ---------------------------------------------------------------------------
B = 2            # batch of images
H_IMG = 16       # image height
W_IMG = 16       # image width
C = 4            # channels
Q = 8            # number of detector queries ("boxes")
HW = H_IMG * W_IMG
META_W = 128     # lane-padded width of the merged boxes+logits output row

BOX_THRESHOLD = 0.1    # dino_args['box_threshold'] default
AREA_THRESHOLD = 4.0   # sam_args['area_threshold'] (scaled down for 16x16 imgs)

# TODO(synk): GroundingDINO swin-T backbone + text encoder and the SAM image
# encoder are external pretrained networks loaded from checkpoints; they are
# replaced here by deterministic synthetic linear heads of matching interface.


def _gsamnet_kernel(x_ref, w_ref, coords_ref, mask_ref, meta_ref):
    """One grid step == one image of the batch.  Lane-dense layout.

    x_ref     : (1, C+1, HW) f32  image channels + constant ones row (bias)
    w_ref     : (6Q, C+1)    f32  packed [box(4Q) | cls(Q) | prompt(Q)] rows,
                                  last column = bias (0 for prompt rows)
    coords_ref: (3, HW)      f32  row 0 = pixel-center x, row 1 = pixel-center y,
                                  row 2 = constant 1/HW (pooling weights)
    mask_ref  : (1, 1, HW)   f32  combined mask (0/1), lane-dense
    meta_ref  : (1, 1, 128)  f32  [x0|y0|x1|y1|logits|zero-pad], lane-dense
    """
    x = x_ref[0]                                              # (C+1, HW)
    w = w_ref[...]                                            # (6Q, C+1)

    # ---- single fused MXU matmul: per-pixel features for all three heads ----
    fused = jnp.dot(w, x, preferred_element_type=jnp.float32)  # (6Q, HW)
    heads = fused[:5 * Q, :]                                   # (5Q, HW) box+cls (bias incl.)
    scores = fused[5 * Q:, :]                                  # (Q, HW)  "SAM" prompt scores

    # ---- pooled detector heads (mean over pixels, folded in by linearity) ---
    # column orientation (Q on sublanes) for the geometry / broadcasting path
    pooled_col = jnp.mean(heads, axis=1, keepdims=True)        # (5Q, 1) XLU lane reduce
    # row orientation (Q on lanes) for the lane-dense meta output, via a tiny
    # ones-row NT matmul on the otherwise idle MXU (no relayout needed).  The
    # 1/HW row lives in coords_ref so no broadcast is materialized per step.
    ones_row = coords_ref[2:3, :]                              # (1, HW) == 1/HW
    pooled_row = jax.lax.dot_general(
        ones_row, heads, (((1,), (1,)), ((), ())),
        preferred_element_type=jnp.float32)                    # (1, 5Q)

    # ---- "GroundingDINO" stand-in, column orientation -----------------------
    box_c = jax.nn.sigmoid(pooled_col[:4 * Q])                 # (4Q, 1) normalized cxcywh
    cx = box_c[0 * Q:1 * Q]
    cy = box_c[1 * Q:2 * Q]
    bw = box_c[2 * Q:3 * Q]
    bh = box_c[3 * Q:4 * Q]
    # box_cxcywh_to_xyxy(box) * [W, H, W, H]
    x0 = (cx - 0.5 * bw) * W_IMG
    y0 = (cy - 0.5 * bh) * H_IMG
    x1 = (cx + 0.5 * bw) * W_IMG
    y1 = (cy + 0.5 * bh) * H_IMG                               # each (Q, 1)

    logits_c = jax.nn.sigmoid(pooled_col[4 * Q:5 * Q])         # (Q, 1)
    keep_box = logits_c > BOX_THRESHOLD                        # box_threshold filter

    # ---- "SAM" stand-in: per-query masks, pixels on lanes -------------------
    px = coords_ref[0:1, :]                                    # (1, HW)
    py = coords_ref[1:2, :]                                    # (1, HW)
    inside = (px >= x0) & (px <= x1) & (py >= y0) & (py <= y1)  # (Q, HW)
    m = inside & (scores > 0.0) & keep_box                      # (Q, HW) bool
    mf = m.astype(jnp.float32)

    # PostProcessor: drop masks whose area is below area_thresh
    area = jnp.sum(mf, axis=1, keepdims=True)                   # (Q, 1) lane reduce
    keep_area = (area >= AREA_THRESHOLD).astype(jnp.float32)    # (Q, 1)
    mf = mf * keep_area

    # torch.any(masks, dim=0) over the per-query masks
    combined = jnp.max(mf, axis=0, keepdims=True)               # (1, HW)
    mask_ref[...] = combined.reshape(1, 1, HW)

    # ---- merged, lane-padded boxes+logits output (row orientation) ----------
    box_r = jax.nn.sigmoid(pooled_row[:, :4 * Q])               # (1, 4Q)
    cxr = box_r[:, 0 * Q:1 * Q]
    cyr = box_r[:, 1 * Q:2 * Q]
    bwr = box_r[:, 2 * Q:3 * Q]
    bhr = box_r[:, 3 * Q:4 * Q]
    x0r = (cxr - 0.5 * bwr) * W_IMG
    y0r = (cyr - 0.5 * bhr) * H_IMG
    x1r = (cxr + 0.5 * bwr) * W_IMG
    y1r = (cyr + 0.5 * bhr) * H_IMG
    logits_r = jax.nn.sigmoid(pooled_row[:, 4 * Q:5 * Q])       # (1, Q)
    meta = jnp.concatenate(
        [x0r, y0r, x1r, y1r, logits_r,
         jnp.zeros((1, META_W - 5 * Q), jnp.float32)], axis=1)  # (1, 128)
    meta_ref[...] = meta.reshape(1, 1, META_W)


@jax.jit
def gsamnet_forward(img_nhwc, w_box, b_box, w_cls, b_cls, w_prompt):
    """img_nhwc: (B, H, W, C) float32.  Returns (mask, boxes_xyxy, logits)."""
    Bn, Hn, Wn, Cn = img_nhwc.shape
    HWn = Hn * Wn

    # Lane-dense layout: pixels on lanes, channels on sublanes; append a ones
    # channel so the packed weight's last column acts as the bias.
    x = img_nhwc.reshape(Bn, HWn, Cn).transpose(0, 2, 1)            # (B, C, HW)
    x_aug = jnp.concatenate(
        [x, jnp.ones((Bn, 1, HWn), jnp.float32)], axis=1)           # (B, C+1, HW)

    # Pack [box | cls | prompt] heads into one weight; fold biases in.
    w_all = jnp.concatenate([w_box.T, w_cls.T, w_prompt.T], axis=0)  # (6Q, C)
    bias_col = jnp.concatenate(
        [b_box.T, b_cls.T, jnp.zeros((Q, 1), jnp.float32)], axis=0)  # (6Q, 1)
    w_aug = jnp.concatenate([w_all, bias_col], axis=1)               # (6Q, C+1)

    # Constant pixel-center coordinate grid + 1/HW pooling row, hoisted out of
    # the kernel (resident input, block index never changes -> fetched once).
    flat = jnp.arange(HWn, dtype=jnp.float32)
    rowy = jnp.floor(flat / Wn)
    colx = flat - rowy * Wn
    coords = jnp.stack(
        [colx + 0.5, rowy + 0.5,
         jnp.full((HWn,), 1.0 / HWn, jnp.float32)], axis=0)          # (3, HW)

    out_shapes = (
        jax.ShapeDtypeStruct((Bn, 1, HWn), jnp.float32),     # combined mask (lane-dense)
        jax.ShapeDtypeStruct((Bn, 1, META_W), jnp.float32),  # merged boxes+logits row
    )

    mask_flat, meta = pl.pallas_call(
        _gsamnet_kernel,
        out_shape=out_shapes,
        grid=(Bn,),
        in_specs=[
            pl.BlockSpec((1, Cn + 1, HWn), lambda b: (b, 0, 0)),
            pl.BlockSpec((6 * Q, Cn + 1), lambda b: (0, 0)),
            pl.BlockSpec((3, HWn), lambda b: (0, 0)),
        ],
        out_specs=(
            pl.BlockSpec((1, 1, HWn), lambda b: (b, 0, 0)),
            pl.BlockSpec((1, 1, META_W), lambda b: (b, 0, 0)),
        ),
        compiler_params=pltpu.CompilerParams(
            dimension_semantics=("parallel",)),
    )(x_aug, w_aug, coords)

    # mask: (B, H, W, 1) bool — matches torch.any(masks, 0).permute(1, 2, 0)
    mask = mask_flat.reshape(Bn, Hn, Wn, 1) > 0.5
    # boxes: (B, Q, 4) xyxy scaled by [W, H, W, H]; logits: (B, Q)
    mrow = meta[:, 0, :]
    boxes = jnp.stack(
        [mrow[:, 0 * Q:1 * Q], mrow[:, 1 * Q:2 * Q],
         mrow[:, 2 * Q:3 * Q], mrow[:, 3 * Q:4 * Q]], axis=-1)
    logits = mrow[:, 4 * Q:5 * Q]
    return mask, boxes, logits


if __name__ == "__main__":
    key = jax.random.PRNGKey(0)
    k_img, k_wb, k_bb, k_wc, k_bc, k_wp = jax.random.split(key, 6)

    img = jax.random.normal(k_img, (B, H_IMG, W_IMG, C), dtype=jnp.float32)

    w_box = 0.5 * jax.random.normal(k_wb, (C, 4 * Q), dtype=jnp.float32)
    b_box = 0.1 * jax.random.normal(k_bb, (1, 4 * Q), dtype=jnp.float32)
    w_cls = 0.5 * jax.random.normal(k_wc, (C, Q), dtype=jnp.float32)
    b_cls = 0.1 * jax.random.normal(k_bc, (1, Q), dtype=jnp.float32)
    w_prompt = 0.5 * jax.random.normal(k_wp, (C, Q), dtype=jnp.float32)

    mask, boxes, logits = gsamnet_forward(img, w_box, b_box, w_cls, b_cls, w_prompt)
    jax.block_until_ready(mask)
    jax.block_until_ready(boxes)
    jax.block_until_ready(logits)

    assert mask.shape == (B, H_IMG, W_IMG, 1) and mask.dtype == jnp.bool_
    assert boxes.shape == (B, Q, 4)
    assert logits.shape == (B, Q)
    print("KERNEL_OK")
</pallas_src>

<mosaic_0001>
module attributes {stable_mosaic.version = 11 : i64} {
  func.func @_gsamnet_kernel(%arg0: i32, %arg1: memref<1x5x256xf32, #tpu.memory_space<vmem>>, %arg2: memref<48x5xf32, #tpu.memory_space<vmem>>, %arg3: memref<3x256xf32, #tpu.memory_space<vmem>>, %arg4: memref<1x1x256xf32, #tpu.memory_space<vmem>>, %arg5: memref<1x1x128xf32, #tpu.memory_space<vmem>>) attributes {dimension_semantics = [#tpu.dimension_semantics<parallel>], iteration_bounds = array<i64: 2>, scalar_prefetch = 0 : i64, scratch_operands = 0 : i64, tpu.core_type = #tpu.core_type<tc>, window_params = [{transform_indices = @transform_0, window_bounds = array<i64: 1, 5, 256>}, {pipeline_mode = #tpu.pipeline_mode<synchronous>, transform_indices = @transform_1, window_bounds = array<i64: 48, 5>}, {pipeline_mode = #tpu.pipeline_mode<synchronous>, transform_indices = @transform_2, window_bounds = array<i64: 3, 256>}, {transform_indices = @transform_3, window_bounds = array<i64: 1, 1, 256>}, {transform_indices = @transform_4, window_bounds = array<i64: 1, 1, 128>}]} {
    %c0 = arith.constant 0 : index
    %c0_0 = arith.constant 0 : index
    %c0_1 = arith.constant 0 : index
    %0 = vector.load %arg1[%c0, %c0_0, %c0_1] : memref<1x5x256xf32, #tpu.memory_space<vmem>>, vector<1x5x256xf32>
    %1 = vector.shape_cast %0 : vector<1x5x256xf32> to vector<5x256xf32>
    %c0_2 = arith.constant 0 : index
    %c0_3 = arith.constant 0 : index
    %2 = vector.load %arg2[%c0_2, %c0_3] : memref<48x5xf32, #tpu.memory_space<vmem>>, vector<48x5xf32>
    %cst = arith.constant dense<0.000000e+00> : vector<48x256xf32>
    %3 = tpu.matmul %2, %1, %cst {dimension_numbers = #tpu.dot_dimension_numbers<[1], [0], [0], [1], [0, 0, 1, 1], [], []>} : vector<48x5xf32>, vector<5x256xf32>, vector<48x256xf32> -> vector<48x256xf32>
    %4 = vector.extract_strided_slice %3 {offsets = [0, 0], sizes = [40, 256], strides = [1, 1]} : vector<48x256xf32> to vector<40x256xf32>
    %5 = vector.extract_strided_slice %3 {offsets = [40, 0], sizes = [8, 256], strides = [1, 1]} : vector<48x256xf32> to vector<8x256xf32>
    %cst_4 = arith.constant dense<0.000000e+00> : vector<40xf32>
    %6 = vector.multi_reduction <add>, %4, %cst_4 [1] : vector<40x256xf32> to vector<40xf32>
    %7 = vector.shape_cast %6 : vector<40xf32> to vector<40x1xf32>
    %cst_5 = arith.constant 2.560000e+02 : f32
    %8 = vector.broadcast %cst_5 : f32 to vector<40x1xf32>
    %9 = arith.divf %7, %8 : vector<40x1xf32>
    %c2 = arith.constant 2 : index
    %c0_6 = arith.constant 0 : index
    %10 = vector.load %arg3[%c2, %c0_6] : memref<3x256xf32, #tpu.memory_space<vmem>>, vector<1x256xf32>
    %cst_7 = arith.constant dense<0.000000e+00> : vector<1x40xf32>
    %11 = tpu.matmul %10, %4, %cst_7 {dimension_numbers = #tpu.dot_dimension_numbers<[1], [1], [0], [0], [0, 0, 1, 0], [], []>} : vector<1x256xf32>, vector<40x256xf32>, vector<1x40xf32> -> vector<1x40xf32>
    %12 = vector.extract_strided_slice %9 {offsets = [0, 0], sizes = [32, 1], strides = [1, 1]} : vector<40x1xf32> to vector<32x1xf32>
    %13 = arith.negf %12 : vector<32x1xf32>
    %14 = math.exp %13 : vector<32x1xf32>
    %cst_8 = arith.constant 1.000000e+00 : f32
    %15 = vector.broadcast %cst_8 : f32 to vector<32x1xf32>
    %16 = arith.addf %15, %14 : vector<32x1xf32>
    %17 = arith.divf %15, %16 : vector<32x1xf32>
    %18 = vector.extract_strided_slice %17 {offsets = [0, 0], sizes = [8, 1], strides = [1, 1]} : vector<32x1xf32> to vector<8x1xf32>
    %19 = vector.extract_strided_slice %17 {offsets = [8, 0], sizes = [8, 1], strides = [1, 1]} : vector<32x1xf32> to vector<8x1xf32>
    %20 = vector.extract_strided_slice %17 {offsets = [16, 0], sizes = [8, 1], strides = [1, 1]} : vector<32x1xf32> to vector<8x1xf32>
    %21 = vector.extract_strided_slice %17 {offsets = [24, 0], sizes = [8, 1], strides = [1, 1]} : vector<32x1xf32> to vector<8x1xf32>
    %cst_9 = arith.constant 5.000000e-01 : f32
    %22 = vector.broadcast %cst_9 : f32 to vector<8x1xf32>
    %23 = arith.mulf %22, %20 : vector<8x1xf32>
    %24 = arith.subf %18, %23 : vector<8x1xf32>
    %cst_10 = arith.constant 1.600000e+01 : f32
    %25 = vector.broadcast %cst_10 : f32 to vector<8x1xf32>
    %26 = arith.mulf %24, %25 : vector<8x1xf32>
    %cst_11 = arith.constant 5.000000e-01 : f32
    %27 = vector.broadcast %cst_11 : f32 to vector<8x1xf32>
    %28 = arith.mulf %27, %21 : vector<8x1xf32>
    %29 = arith.subf %19, %28 : vector<8x1xf32>
    %cst_12 = arith.constant 1.600000e+01 : f32
    %30 = vector.broadcast %cst_12 : f32 to vector<8x1xf32>
    %31 = arith.mulf %29, %30 : vector<8x1xf32>
    %cst_13 = arith.constant 5.000000e-01 : f32
    %32 = vector.broadcast %cst_13 : f32 to vector<8x1xf32>
    %33 = arith.mulf %32, %20 : vector<8x1xf32>
    %34 = arith.addf %18, %33 : vector<8x1xf32>
    %cst_14 = arith.constant 1.600000e+01 : f32
    %35 = vector.broadcast %cst_14 : f32 to vector<8x1xf32>
    %36 = arith.mulf %34, %35 : vector<8x1xf32>
    %cst_15 = arith.constant 5.000000e-01 : f32
    %37 = vector.broadcast %cst_15 : f32 to vector<8x1xf32>
    %38 = arith.mulf %37, %21 : vector<8x1xf32>
    %39 = arith.addf %19, %38 : vector<8x1xf32>
    %cst_16 = arith.constant 1.600000e+01 : f32
    %40 = vector.broadcast %cst_16 : f32 to vector<8x1xf32>
    %41 = arith.mulf %39, %40 : vector<8x1xf32>
    %42 = vector.extract_strided_slice %9 {offsets = [32, 0], sizes = [8, 1], strides = [1, 1]} : vector<40x1xf32> to vector<8x1xf32>
    %43 = arith.negf %42 : vector<8x1xf32>
    %44 = math.exp %43 : vector<8x1xf32>
    %cst_17 = arith.constant 1.000000e+00 : f32
    %45 = vector.broadcast %cst_17 : f32 to vector<8x1xf32>
    %46 = arith.addf %45, %44 : vector<8x1xf32>
    %47 = arith.divf %45, %46 : vector<8x1xf32>
    %cst_18 = arith.constant 1.000000e-01 : f32
    %48 = vector.broadcast %cst_18 : f32 to vector<8x1xf32>
    %49 = arith.cmpf ogt, %47, %48 : vector<8x1xf32>
    %c0_19 = arith.constant 0 : index
    %c0_20 = arith.constant 0 : index
    %50 = vector.load %arg3[%c0_19, %c0_20] : memref<3x256xf32, #tpu.memory_space<vmem>>, vector<1x256xf32>
    %c1 = arith.constant 1 : index
    %c0_21 = arith.constant 0 : index
    %51 = vector.load %arg3[%c1, %c0_21] : memref<3x256xf32, #tpu.memory_space<vmem>>, vector<1x256xf32>
    %52 = vector.broadcast %50 : vector<1x256xf32> to vector<8x256xf32>
    %53 = vector.broadcast %26 : vector<8x1xf32> to vector<8x256xf32>
    %54 = arith.cmpf oge, %52, %53 : vector<8x256xf32>
    %55 = vector.broadcast %50 : vector<1x256xf32> to vector<8x256xf32>
    %56 = vector.broadcast %36 : vector<8x1xf32> to vector<8x256xf32>
    %57 = arith.cmpf ole, %55, %56 : vector<8x256xf32>
    %58 = arith.andi %54, %57 : vector<8x256xi1>
    %59 = vector.broadcast %51 : vector<1x256xf32> to vector<8x256xf32>
    %60 = vector.broadcast %31 : vector<8x1xf32> to vector<8x256xf32>
    %61 = arith.cmpf oge, %59, %60 : vector<8x256xf32>
    %62 = arith.andi %58, %61 : vector<8x256xi1>
    %63 = vector.broadcast %51 : vector<1x256xf32> to vector<8x256xf32>
    %64 = vector.broadcast %41 : vector<8x1xf32> to vector<8x256xf32>
    %65 = arith.cmpf ole, %63, %64 : vector<8x256xf32>
    %66 = arith.andi %62, %65 : vector<8x256xi1>
    %cst_22 = arith.constant 0.000000e+00 : f32
    %67 = vector.broadcast %cst_22 : f32 to vector<8x256xf32>
    %68 = arith.cmpf ogt, %5, %67 : vector<8x256xf32>
    %69 = arith.andi %66, %68 : vector<8x256xi1>
    %70 = vector.broadcast %49 : vector<8x1xi1> to vector<8x256xi1>
    %71 = arith.andi %69, %70 : vector<8x256xi1>
    %72 = arith.extui %71 : vector<8x256xi1> to vector<8x256xi32>
    %73 = arith.sitofp %72 : vector<8x256xi32> to vector<8x256xf32>
    %cst_23 = arith.constant dense<0.000000e+00> : vector<8xf32>
    %74 = vector.multi_reduction <add>, %73, %cst_23 [1] : vector<8x256xf32> to vector<8xf32>
    %75 = vector.shape_cast %74 : vector<8xf32> to vector<8x1xf32>
    %cst_24 = arith.constant 4.000000e+00 : f32
    %76 = vector.broadcast %cst_24 : f32 to vector<8x1xf32>
    %77 = arith.cmpf oge, %75, %76 : vector<8x1xf32>
    %78 = arith.extui %77 : vector<8x1xi1> to vector<8x1xi32>
    %79 = arith.sitofp %78 : vector<8x1xi32> to vector<8x1xf32>
    %80 = vector.broadcast %79 : vector<8x1xf32> to vector<8x256xf32>
    %81 = arith.mulf %73, %80 : vector<8x256xf32>
    %cst_25 = arith.constant dense<0xFF800000> : vector<256xf32>
    %82 = vector.multi_reduction <maximumf>, %81, %cst_25 [0] : vector<8x256xf32> to vector<256xf32>
    %83 = vector.shape_cast %82 : vector<256xf32> to vector<1x256xf32>
    %84 = vector.shape_cast %83 : vector<1x256xf32> to vector<1x1x256xf32>
    %c0_26 = arith.constant 0 : index
    %c0_27 = arith.constant 0 : index
    %c0_28 = arith.constant 0 : index
    %85 = vector.load %arg4[%c0_26, %c0_27, %c0_28] : memref<1x1x256xf32, #tpu.memory_space<vmem>>, vector<1x1x256xf32>
    tpu.vector_store %arg4[%c0_26, %c0_27, %c0_28], %84 {strides = array<i32>} : memref<1x1x256xf32, #tpu.memory_space<vmem>>, vector<1x1x256xf32>,
    %86 = vector.extract_strided_slice %11 {offsets = [0, 0], sizes = [1, 32], strides = [1, 1]} : vector<1x40xf32> to vector<1x32xf32>
    %87 = arith.negf %86 : vector<1x32xf32>
    %88 = math.exp %87 : vector<1x32xf32>
    %cst_29 = arith.constant 1.000000e+00 : f32
    %89 = vector.broadcast %cst_29 : f32 to vector<1x32xf32>
    %90 = arith.addf %89, %88 : vector<1x32xf32>
    %91 = arith.divf %89, %90 : vector<1x32xf32>
    %92 = vector.extract_strided_slice %91 {offsets = [0, 0], sizes = [1, 8], strides = [1, 1]} : vector<1x32xf32> to vector<1x8xf32>
    %93 = vector.extract_strided_slice %91 {offsets = [0, 8], sizes = [1, 8], strides = [1, 1]} : vector<1x32xf32> to vector<1x8xf32>
    %94 = vector.extract_strided_slice %91 {offsets = [0, 16], sizes = [1, 8], strides = [1, 1]} : vector<1x32xf32> to vector<1x8xf32>
    %95 = vector.extract_strided_slice %91 {offsets = [0, 24], sizes = [1, 8], strides = [1, 1]} : vector<1x32xf32> to vector<1x8xf32>
    %cst_30 = arith.constant 5.000000e-01 : f32
    %96 = vector.broadcast %cst_30 : f32 to vector<1x8xf32>
    %97 = arith.mulf %96, %94 : vector<1x8xf32>
    %98 = arith.subf %92, %97 : vector<1x8xf32>
    %cst_31 = arith.constant 1.600000e+01 : f32
    %99 = vector.broadcast %cst_31 : f32 to vector<1x8xf32>
    %100 = arith.mulf %98, %99 : vector<1x8xf32>
    %cst_32 = arith.constant 5.000000e-01 : f32
    %101 = vector.broadcast %cst_32 : f32 to vector<1x8xf32>
    %102 = arith.mulf %101, %95 : vector<1x8xf32>
    %103 = arith.subf %93, %102 : vector<1x8xf32>
    %cst_33 = arith.constant 1.600000e+01 : f32
    %104 = vector.broadcast %cst_33 : f32 to vector<1x8xf32>
    %105 = arith.mulf %103, %104 : vector<1x8xf32>
    %cst_34 = arith.constant 5.000000e-01 : f32
    %106 = vector.broadcast %cst_34 : f32 to vector<1x8xf32>
    %107 = arith.mulf %106, %94 : vector<1x8xf32>
    %108 = arith.addf %92, %107 : vector<1x8xf32>
    %cst_35 = arith.constant 1.600000e+01 : f32
    %109 = vector.broadcast %cst_35 : f32 to vector<1x8xf32>
    %110 = arith.mulf %108, %109 : vector<1x8xf32>
    %cst_36 = arith.constant 5.000000e-01 : f32
    %111 = vector.broadcast %cst_36 : f32 to vector<1x8xf32>
    %112 = arith.mulf %111, %95 : vector<1x8xf32>
    %113 = arith.addf %93, %112 : vector<1x8xf32>
    %cst_37 = arith.constant 1.600000e+01 : f32
    %114 = vector.broadcast %cst_37 : f32 to vector<1x8xf32>
    %115 = arith.mulf %113, %114 : vector<1x8xf32>
    %116 = vector.extract_strided_slice %11 {offsets = [0, 32], sizes = [1, 8], strides = [1, 1]} : vector<1x40xf32> to vector<1x8xf32>
    %117 = arith.negf %116 : vector<1x8xf32>
    %118 = math.exp %117 : vector<1x8xf32>
    %cst_38 = arith.constant 1.000000e+00 : f32
    %119 = vector.broadcast %cst_38 : f32 to vector<1x8xf32>
    %120 = arith.addf %119, %118 : vector<1x8xf32>
    %121 = arith.divf %119, %120 : vector<1x8xf32>
    %cst_39 = arith.constant 0.000000e+00 : f32
    %122 = vector.broadcast %cst_39 : f32 to vector<1x88xf32>
    %123 = tpu.concatenate %100, %105, %110, %115, %121, %122 in 1 : vector<1x8xf32>, vector<1x8xf32>, vector<1x8xf32>, vector<1x8xf32>, vector<1x8xf32>, vector<1x88xf32> -> vector<1x128xf32>
    %124 = vector.shape_cast %123 : vector<1x128xf32> to vector<1x1x128xf32>
    %c0_40 = arith.constant 0 : index
    %c0_41 = arith.constant 0 : index
    %c0_42 = arith.constant 0 : index
    %125 = vector.load %arg5[%c0_40, %c0_41, %c0_42] : memref<1x1x128xf32, #tpu.memory_space<vmem>>, vector<1x1x128xf32>
    tpu.vector_store %arg5[%c0_40, %c0_41, %c0_42], %124 {strides = array<i32>} : memref<1x1x128xf32, #tpu.memory_space<vmem>>, vector<1x1x128xf32>,
    return
  }
  func.func @transform_0(%arg0: i32) -> (i32, i32, i32) {
    %c0_i32 = arith.constant 0 : i32
    %c0_i32_0 = arith.constant 0 : i32
    %c0_i32_1 = arith.constant 0 : i32
    return %arg0, %c0_i32, %c0_i32_0 : i32, i32, i32
  }
  func.func @transform_1(%arg0: i32) -> (i32, i32) {
    %c0_i32 = arith.constant 0 : i32
    %c0_i32_0 = arith.constant 0 : i32
    %c0_i32_1 = arith.constant 0 : i32
    return %c0_i32, %c0_i32_0 : i32, i32
  }
  func.func @transform_2(%arg0: i32) -> (i32, i32) {
    %c0_i32 = arith.constant 0 : i32
    %c0_i32_0 = arith.constant 0 : i32
    %c0_i32_1 = arith.constant 0 : i32
    return %c0_i32, %c0_i32_0 : i32, i32
  }
  func.func @transform_3(%arg0: i32) -> (i32, i32, i32) {
    %c0_i32 = arith.constant 0 : i32
    %c0_i32_0 = arith.constant 0 : i32
    %c0_i32_1 = arith.constant 0 : i32
    return %arg0, %c0_i32, %c0_i32_0 : i32, i32, i32
  }
  func.func @transform_4(%arg0: i32) -> (i32, i32, i32) {
    %c0_i32 = arith.constant 0 : i32
    %c0_i32_0 = arith.constant 0 : i32
    %c0_i32_1 = arith.constant 0 : i32
    return %arg0, %c0_i32, %c0_i32_0 : i32, i32, i32
  }
}

</mosaic_0001>

<llo_original>
// kernel: gsamnet_forward.1
$region0: #{gsamnet_forward.1}
  #allocation0 [shape = 'u32[]', space=smem, size = 0x4, offset = 0x4, fixed_abs, tag = 'smem constant byte address 0x4 - core index']
  #allocation1 [shape = 'u32[144,128]{1,0:T(1,128)}', space=vmem, size = 0x12000, scoped, tag = 'internal scratch']
  %s0 = inlined_call_operand.vmem [shape: f32[2,5,256], index: 0, kind: input, shape index: {}]
  %s1 = inlined_call_operand.vmem [shape: f32[48,5], index: 1, kind: input, shape index: {}]
  %s2 = inlined_call_operand.vmem [shape: f32[3,256], index: 2, kind: input, shape index: {}]
  %s3 = inlined_call_operand.vmem [shape: f32[2,1,256], index: 3, kind: output, shape index: {0}]
  %s4 = inlined_call_operand.vmem [shape: f32[2,1,128], index: 4, kind: output, shape index: {1}]
  %5 = xla_tuple %s3, %s4
  %s6 = sld [smem:[#allocation0]]
  $region53: #{gsamnet_forward.1} parent=0
    _
  %s8 = ssub.s32 1, %s6
  %s9 = scalar_select 0, %s8, %s6
  loop: start=0, step=1, limit=4
  $region2: #{gsamnet_forward.1} parent=0 // loop_pre_header
    _
  $region3: #{gsamnet_forward.1} parent=0 // loop_header
    %s11 = sphi 0, %s15
    %p12 = scmp.ge.s32.totalorder %s11, 4
    %s21 = sphi 0, %s23
    %s24 = sphi 0, %s21
    %s25 = sphi 0, %s24
    %s41 = sphi 0, %s25
    %s45 = sphi 0, %s45
    %s47 = sphi 0, %s45
    %s48 = sphi 0, %s47
    %s62 = sphi 0, %s48
    %s66 = sphi 0, %s66
    %s68 = sphi 0, %s66
    %s69 = sphi 0, %s68
    %s83 = sphi 0, %s69
    %s89 = sphi 0, %s91
    %s92 = sphi 0, %s89
    %s93 = sphi 0, %s92
    %s109 = sphi 0, %s93
    %s115 = sphi 0, %s117
    %s118 = sphi 0, %s115
    %s119 = sphi 0, %s118
    %s135 = sphi 0, %s119
  $region4: #{gsamnet_forward.1} parent=0 // loop_header_branch
    %14 = sbr.rel (%p12) target = $region8
  $region5: #{gsamnet_forward.1} parent=0 // loop_body
    %s16 = ssub.s32 %s11, 1
    %s17 = ssub.s32 %s11, 2
    %s18 = sadd.s32 %s11, 1
    %s19 = ssub.s32 %s11, %s18
    %p20 = scmp.eq.s32.totalorder %s19, 0
    %s22 = sadd.s32 %s21, 1
    %s23 = scalar_select %p20, %s21, %s22
    %p26 = pneg %p20
    %p27 = scmp.eq.s32.totalorder %s11, 1
    %p28 = por %p26, %p27
    %p29 = scmp.ne.s32.totalorder %s21, %s24
    %p30 = scmp.eq.s32.totalorder %s11, 0
    %p31 = por %p29, %p30
    %p32 = scmp.ne.s32.totalorder %s21, %s24
    %p33 = scmp.eq.s32.totalorder %s16, 1
    %p34 = por %p32, %p33
    %p35 = scmp.ne.s32.totalorder %s24, %s25
    %p36 = scmp.eq.s32.totalorder %s16, 0
    %p37 = por %p35, %p36
    %p38 = scmp.ne.s32.totalorder %s24, %s25
    %p39 = scmp.eq.s32.totalorder %s17, 1
    %p40 = por %p38, %p39
    %p42 = scmp.ne.s32.totalorder %s25, %s41
    %p43 = scmp.eq.s32.totalorder %s17, 0
    %p44 = por %p42, %p43
    %s46 = sadd.s32 %s45, 1
    %p49 = scmp.eq.s32.totalorder %s11, 1
    %p50 = scmp.ne.s32.totalorder %s45, %s47
    %p51 = scmp.eq.s32.totalorder %s11, 0
    %p52 = por %p50, %p51
    %p53 = scmp.ne.s32.totalorder %s45, %s47
    %p54 = scmp.eq.s32.totalorder %s16, 1
    %p55 = por %p53, %p54
    %p56 = scmp.ne.s32.totalorder %s47, %s48
    %p57 = scmp.eq.s32.totalorder %s16, 0
    %p58 = por %p56, %p57
    %p59 = scmp.ne.s32.totalorder %s47, %s48
    %p60 = scmp.eq.s32.totalorder %s17, 1
    %p61 = por %p59, %p60
    %p63 = scmp.ne.s32.totalorder %s48, %s62
    %p64 = scmp.eq.s32.totalorder %s17, 0
    %p65 = por %p63, %p64
    %s67 = sadd.s32 %s66, 1
    %p70 = scmp.eq.s32.totalorder %s11, 1
    %p71 = scmp.ne.s32.totalorder %s66, %s68
    %p72 = scmp.eq.s32.totalorder %s11, 0
    %p73 = por %p71, %p72
    %p74 = scmp.ne.s32.totalorder %s66, %s68
    %p75 = scmp.eq.s32.totalorder %s16, 1
    %p76 = por %p74, %p75
    %p77 = scmp.ne.s32.totalorder %s68, %s69
    %p78 = scmp.eq.s32.totalorder %s16, 0
    %p79 = por %p77, %p78
    %p80 = scmp.ne.s32.totalorder %s68, %s69
    %p81 = scmp.eq.s32.totalorder %s17, 1
    %p82 = por %p80, %p81
    %p84 = scmp.ne.s32.totalorder %s69, %s83
    %p85 = scmp.eq.s32.totalorder %s17, 0
    %p86 = por %p84, %p85
    %s87 = ssub.s32 %s11, %s18
    %p88 = scmp.eq.s32.totalorder %s87, 0
    %s90 = sadd.s32 %s89, 1
    %s91 = scalar_select %p88, %s89, %s90
    %p94 = pneg %p88
    %p95 = scmp.eq.s32.totalorder %s11, 1
    %p96 = por %p94, %p95
    %p97 = scmp.ne.s32.totalorder %s89, %s92
    %p98 = scmp.eq.s32.totalorder %s11, 0
    %p99 = por %p97, %p98
    %p100 = scmp.ne.s32.totalorder %s89, %s92
    %p101 = scmp.eq.s32.totalorder %s16, 1
    %p102 = por %p100, %p101
    %p103 = scmp.ne.s32.totalorder %s92, %s93
    %p104 = scmp.eq.s32.totalorder %s16, 0
    %p105 = por %p103, %p104
    %p106 = scmp.ne.s32.totalorder %s92, %s93
    %p107 = scmp.eq.s32.totalorder %s17, 1
    %p108 = por %p106, %p107
    %p110 = scmp.ne.s32.totalorder %s93, %s109
    %p111 = scmp.eq.s32.totalorder %s17, 0
    %p112 = por %p110, %p111
    %s113 = ssub.s32 %s11, %s18
    %p114 = scmp.eq.s32.totalorder %s113, 0
    %s116 = sadd.s32 %s115, 1
    %s117 = scalar_select %p114, %s115, %s116
    %p120 = pneg %p114
    %p121 = scmp.eq.s32.totalorder %s11, 1
    %p122 = por %p120, %p121
    %p123 = scmp.ne.s32.totalorder %s115, %s118
    %p124 = scmp.eq.s32.totalorder %s11, 0
    %p125 = por %p123, %p124
    %p126 = scmp.ne.s32.totalorder %s115, %s118
    %p127 = scmp.eq.s32.totalorder %s16, 1
    %p128 = por %p126, %p127
    %p129 = scmp.ne.s32.totalorder %s118, %s119
    %p130 = scmp.eq.s32.totalorder %s16, 0
    %p131 = por %p129, %p130
    %p132 = scmp.ne.s32.totalorder %s118, %s119
    %p133 = scmp.eq.s32.totalorder %s17, 1
    %p134 = por %p132, %p133
    %p136 = scmp.ne.s32.totalorder %s119, %s135
    %p137 = scmp.eq.s32.totalorder %s17, 0
    %p138 = por %p136, %p137
    %p139 = scmp.le.s32.totalorder 1, %s11
    %p140 = scmp.lt.s32.totalorder %s11, 3
    %p141 = pnand %p139, %p140
    %p142 = pneg %p141
    // Predicated region
    $region9: #{gsamnet_forward.1} parent=5 // pred_check
      _
    $region10: #{gsamnet_forward.1} parent=5 // pred_check_branch
      %144 = sbr.rel (%p141) target = $region12
    $region11: #{gsamnet_forward.1} parent=5 // pred_region
      %s145 = ssub.s32 %s11, 1
      // Predicated region
      $region13: #{gsamnet_forward.1} parent=11 // pred_check
        %p146 = pneg %p58
      $region14: #{gsamnet_forward.1} parent=11 // pred_check_branch
        %148 = sbr.rel (%p146) target = $region16
      $region15: #{gsamnet_forward.1} parent=11 // pred_region
        _
      $region16: #{gsamnet_forward.1} parent=11 // pred_fallthru
        _
      // Predicated region
      $region17: #{gsamnet_forward.1} parent=11 // pred_check
        %p149 = pneg %p79
      $region18: #{gsamnet_forward.1} parent=11 // pred_check_branch
        %151 = sbr.rel (%p149) target = $region20
      $region19: #{gsamnet_forward.1} parent=11 // pred_region
        _
      $region20: #{gsamnet_forward.1} parent=11 // pred_fallthru
        _
    $region12: #{gsamnet_forward.1} parent=5 // pred_fallthru
      _
    %p152 = scmp.lt.s32.totalorder %s11, 2
    // Predicated region
    $region21: #{gsamnet_forward.1} parent=5 // pred_check
      %p153 = pneg %p152
    $region22: #{gsamnet_forward.1} parent=5 // pred_check_branch
      %155 = sbr.rel (%p153) target = $region24
    $region23: #{gsamnet_forward.1} parent=5 // pred_region
      // Predicated region
      $region25: #{gsamnet_forward.1} parent=23 // pred_check
        %p156 = pneg %p31
      $region26: #{gsamnet_forward.1} parent=23 // pred_check_branch
        %158 = sbr.rel (%p156) target = $region28
      $region27: #{gsamnet_forward.1} parent=23 // pred_region
        %p159 = scmp.lt.s32.totalorder %s11, 1
        %s160 = scalar_select %p159, %s11, 1
        %s161 = smul.addr %s160, 2
        %s162 = smul.addr %s161, 8
        %s163 = scalar_lea.vmem %s0, %s162
      $region28: #{gsamnet_forward.1} parent=23 // pred_fallthru
        _
    $region24: #{gsamnet_forward.1} parent=5 // pred_fallthru
      _
    %p164 = scmp.le.s32.totalorder 1, %s11
    %p165 = scmp.lt.s32.totalorder %s11, 3
    %p166 = pnand %p164, %p165
    %p167 = pneg %p166
    // Predicated region
    $region29: #{gsamnet_forward.1} parent=5 // pred_check
      _
    $region30: #{gsamnet_forward.1} parent=5 // pred_check_branch
      %169 = sbr.rel (%p166) target = $region32
    $region31: #{gsamnet_forward.1} parent=5 // pred_region
      %s170 = ssub.s32 %s11, 1
      %p171 = scmp.lt.s32.totalorder %s16, 1
      %s172 = scalar_select %p171, %s16, 1
      %s173 = smul.addr %s172, 2
      %s174 = smul.addr %s173, 8
      %s175 = scalar_lea.vmem %s0, %s174
      %p176 = pneg %p37
      %p177 = pneg %p34
      %p178 = pneg %p58
      %p179 = pneg %p55
      %p180 = pneg %p79
      %p181 = pneg %p76
      %p182 = pneg %p105
      %p183 = pneg %p102
      %p184 = scmp.lt.s32.totalorder %s16, 1
      %s185 = scalar_select %p184, %s16, 1
      %s186 = smul.addr %s185, 2
      %s187 = scalar_lea.vmem %s3, %s186
      %p188 = pneg %p131
      %p189 = pneg %p128
      %p190 = scmp.lt.s32.totalorder %s16, 1
      %s191 = scalar_select %p190, %s16, 1
      %s192 = scalar_lea.vmem %s4, %s191
      %p193 = scmp.lt.s32.totalorder %s16, 1
      %s194 = scalar_select %p193, %s16, 1
      %s195 = smul.addr %s194, 2
      %s196 = smul.addr %s195, 8
      %s197 = scalar_lea.vmem %s0, %s196
      %p198 = scmp.lt.s32.totalorder %s16, 1
      %s199 = scalar_select %p198, %s16, 1
      %s200 = smul.addr %s199, 2
      %s201 = scalar_lea.vmem %s3, %s200
      %p202 = scmp.lt.s32.totalorder %s16, 1
      %s203 = scalar_select %p202, %s16, 1
      %s204 = scalar_lea.vmem %s4, %s203
      %v205 = vld [vmem:[%s197] sm:$0x1f]
      %v206 = vld [vmem:[%s197 + $0x8] sm:$0x1f]
      %v207 = vld [vmem:[%s1] sm:$0xff]
      %v208 = vld [vmem:[%s1 + $0x8] sm:$0xff]
      %v209 = vld [vmem:[%s1 + $0x10] sm:$0xff]
      %v210 = vld [vmem:[%s1 + $0x18] sm:$0xff]
      %v211 = vld [vmem:[%s1 + $0x20] sm:$0xff]
      %v212 = vld [vmem:[%s1 + $0x28] sm:$0xff]
      %vm213 = vcmask 39936
      %v215 = vsel %vm213, %v207, 0
      %v218 = vsel %vm213, %v208, 0
      %v221 = vsel %vm213, %v209, 0
      %v224 = vsel %vm213, %v210, 0
      %v227 = vsel %vm213, %v211, 0
      %v230 = vsel %vm213, %v212, 0
      %vm232 = vcmask 1044480
      %v234 = vsel %vm232, %v205, 0
      %v237 = vsel %vm232, %v206, 0
      %239 = vmatprep.subr.mxu0 0.0
      %240 = vmatpush1.msra.mxu0 0.0
      %241 = vmatprep.subr.mxu0 0.0
      %242 = vmatpush1.msra.mxu0 0.0
      %243 = vmatprep.subr.mxu0 0.0
      %244 = vmatpush1.msra.mxu0 0.0
      %245 = vmatprep.subr.mxu0 0.0
      %246 = vmatpush1.msra.mxu0 0.0
      %247 = vmatprep.subr.mxu0 0.0
      %248 = vmatpush1.msra.mxu0 0.0
      %249 = vmatprep.subr.mxu0 0.0
      %250 = vmatpush1.msra.mxu0 0.0
      %251 = vmatprep.subr.mxu0 0.0
      %252 = vmatpush1.msra.mxu0 0.0
      %253 = vmatprep.subr.mxu0 0.0
      %254 = vmatpush1.msra.mxu0 0.0
      %255 = vmatprep.subr.mxu0 0.0
      %256 = vmatpush1.msra.mxu0 0.0
      %257 = vmatprep.subr.mxu0 0.0
      %258 = vmatpush1.msra.mxu0 0.0
      %259 = vmatprep.subr.mxu0 0.0
      %260 = vmatpush1.msra.mxu0 0.0
      %261 = vmatprep.subr.mxu0 0.0
      %262 = vmatpush1.msra.mxu0 0.0
      %263 = vmatprep.subr.mxu0 0.0
      %264 = vmatpush1.msra.mxu0 0.0
      %265 = vmatprep.subr.mxu0 0.0
      %266 = vmatpush1.msra.mxu0 0.0
      %267 = vmatprep.subr.mxu0 0.0
      %268 = vmatpush1.msra.mxu0 0.0
      %269 = vmatprep.subr.mxu0 %v237
      %270 = vmatpush1.msra.mxu0 %v234
      %271 = vmatprep.subr.mxu0 0.0
      %272 = vmatpush2.msra.mxu0 0.0
      %273 = vmatprep.subr.mxu0 0.0
      %274 = vmatpush2.msra.mxu0 0.0
      %275 = vmatprep.subr.mxu0 0.0
      %276 = vmatpush2.msra.mxu0 0.0
      %277 = vmatprep.subr.mxu0 0.0
      %278 = vmatpush2.msra.mxu0 0.0
      %279 = vmatprep.subr.mxu0 0.0
      %280 = vmatpush2.msra.mxu0 0.0
      %281 = vmatprep.subr.mxu0 0.0
      %282 = vmatpush2.msra.mxu0 0.0
      %283 = vmatprep.subr.mxu0 0.0
      %284 = vmatpush2.msra.mxu0 0.0
      %285 = vmatprep.subr.mxu0 0.0
      %286 = vmatpush2.msra.mxu0 0.0
      %287 = vmatprep.subr.mxu0 0.0
      %288 = vmatpush2.msra.mxu0 0.0
      %289 = vmatprep.subr.mxu0 0.0
      %290 = vmatpush2.msra.mxu0 0.0
      %291 = vmatprep.subr.mxu0 0.0
      %292 = vmatpush2.msra.mxu0 0.0
      %293 = vmatprep.subr.mxu0 0.0
      %294 = vmatpush2.msra.mxu0 0.0
      %295 = vmatprep.subr.mxu0 0.0
      %296 = vmatpush2.msra.mxu0 0.0
      %297 = vmatprep.subr.mxu0 0.0
      %298 = vmatpush2.msra.mxu0 0.0
      %299 = vmatprep.subr.mxu0 0.0
      %300 = vmatpush2.msra.mxu0 0.0
      %301 = vmatprep.subr.mxu0 0.0
      %302 = vmatpush2.msra.mxu0 0.0
      %303 = vmatprep.mubr.f32.mxu0 0.0
      %304 = vmatmul.mubr.f32.gmra.mxu0 %v215
      %v305 = vpop.f32.mrf.mxu0
      %v306 = vadd.f32 0.0, %v305
      %v307 = vpop.f32.mrf.mxu0
      %v308 = vadd.f32 0.0, %v307
      %309 = vmatprep.mubr.f32.mxu0 0.0
      %310 = vmatmul.mubr.f32.gmra.mxu0 %v218
      %v311 = vpop.f32.mrf.mxu0
      %v312 = vadd.f32 0.0, %v311
      %v313 = vpop.f32.mrf.mxu0
      %v314 = vadd.f32 0.0, %v313
      %315 = vmatprep.mubr.f32.mxu0 0.0
      %316 = vmatmul.mubr.f32.gmra.mxu0 %v221
      %v317 = vpop.f32.mrf.mxu0
      %v318 = vadd.f32 0.0, %v317
      %v319 = vpop.f32.mrf.mxu0
      %v320 = vadd.f32 0.0, %v319
      %321 = vmatprep.mubr.f32.mxu0 0.0
      %322 = vmatmul.mubr.f32.gmra.mxu0 %v224
      %v323 = vpop.f32.mrf.mxu0
      %v324 = vadd.f32 0.0, %v323
      %v325 = vpop.f32.mrf.mxu0
      %v326 = vadd.f32 0.0, %v325
      %327 = vmatprep.mubr.f32.mxu0 0.0
      %328 = vmatmul.mubr.f32.gmra.mxu0 %v227
      %v329 = vpop.f32.mrf.mxu0
      %v330 = vadd.f32 0.0, %v329
      %v331 = vpop.f32.mrf.mxu0
      %v332 = vadd.f32 0.0, %v331
      %333 = vmatprep.mubr.f32.mxu0 0.0
      %334 = vmatmul.mubr.f32.gmra.mxu0 %v230
      %v335 = vpop.f32.mrf.mxu0
      %v336 = vadd.f32 0.0, %v335
      %v337 = vpop.f32.mrf.mxu0
      %v338 = vadd.f32 0.0, %v337
      %339 = vdwg.mxu0
      %v340 = vadd.f32 %v306, %v308
      %341 = vadd.xlane.f32.xlu0 %v340
      %v342 = vpop.xlane.xlu0 %341
      %v343 = vadd.f32 %v312, %v314
      %344 = vadd.xlane.f32.xlu0 %v343
      %v345 = vpop.xlane.xlu0 %344
      %v346 = vadd.f32 %v318, %v320
      %347 = vadd.xlane.f32.xlu0 %v346
      %v348 = vpop.xlane.xlu0 %347
      %v349 = vadd.f32 %v324, %v326
      %350 = vadd.xlane.f32.xlu0 %v349
      %v351 = vpop.xlane.xlu0 %350
      %v352 = vadd.f32 %v330, %v332
      %353 = vadd.xlane.f32.xlu0 %v352
      %v354 = vpop.xlane.xlu0 %353
      %v355 = vrcp.pop 256.0
      %v356 = vmul.f32 %v342, %v355
      %v357 = vmul.f32 %v345, %v355
      %v358 = vmul.f32 %v348, %v355
      %v359 = vmul.f32 %v351, %v355
      %v360 = vmul.f32 %v354, %v355
      %s361 = scalar_lea.vmem %s2, 2
      %v362 = vld [vmem:[%s361] ss:$4 sm:$0x3]
      %v364 = vlaneseq
      %v365 = vshrl.u32 %v364, 7
      %v366 = vsub.s32 0, %v365
      %v367 = vrot.slane %v362, %v366
      %v368 = vlaneseq
      %v369 = vshrl.u32 %v368, 7
      %v370 = vsub.s32 1, %v369
      %v371 = vrot.slane %v362, %v370
      %374 = vmatprep.subr.mxu0 0.0
      %375 = vmatpush1.xpose.msra.mxu0 0.0
      %376 = vmatprep.subr.mxu0 0.0
      %377 = vmatpush1.xpose.msra.mxu0 0.0
      %378 = vmatprep.subr.mxu0 0.0
      %379 = vmatpush1.xpose.msra.mxu0 0.0
      %380 = vmatprep.subr.mxu0 0.0
      %381 = vmatpush1.xpose.msra.mxu0 0.0
      %382 = vmatprep.subr.mxu0 0.0
      %383 = vmatpush1.xpose.msra.mxu0 0.0
      %384 = vmatprep.subr.mxu0 0.0
      %385 = vmatpush1.xpose.msra.mxu0 0.0
      %386 = vmatprep.subr.mxu0 0.0
      %387 = vmatpush1.xpose.msra.mxu0 0.0
      %388 = vmatprep.subr.mxu0 0.0
      %389 = vmatpush1.xpose.msra.mxu0 0.0
      %390 = vmatprep.subr.mxu0 0.0
      %391 = vmatpush1.xpose.msra.mxu0 0.0
      %392 = vmatprep.subr.mxu0 0.0
      %393 = vmatpush1.xpose.msra.mxu0 0.0
      %394 = vmatprep.subr.mxu0 0.0
      %395 = vmatpush1.xpose.msra.mxu0 0.0
      %396 = vmatprep.subr.mxu0 %v332
      %397 = vmatpush1.xpose.msra.mxu0 %v330
      %398 = vmatprep.subr.mxu0 %v326
      %399 = vmatpush1.xpose.msra.mxu0 %v324
      %400 = vmatprep.subr.mxu0 %v320
      %401 = vmatpush1.xpose.msra.mxu0 %v318
      %402 = vmatprep.subr.mxu0 %v314
      %403 = vmatpush1.xpose.msra.mxu0 %v312
      %404 = vmatprep.subr.mxu0 %v308
      %405 = vmatpush1.xpose.msra.mxu0 %v306
      %406 = vmatprep.subr.mxu0 0.0
      %407 = vmatpush2.xpose.msra.mxu0 0.0
      %408 = vmatprep.subr.mxu0 0.0
      %409 = vmatpush2.xpose.msra.mxu0 0.0
      %410 = vmatprep.subr.mxu0 0.0
      %411 = vmatpush2.xpose.msra.mxu0 0.0
      %412 = vmatprep.subr.mxu0 0.0
      %413 = vmatpush2.xpose.msra.mxu0 0.0
      %414 = vmatprep.subr.mxu0 0.0
      %415 = vmatpush2.xpose.msra.mxu0 0.0
      %416 = vmatprep.subr.mxu0 0.0
      %417 = vmatpush2.xpose.msra.mxu0 0.0
      %418 = vmatprep.subr.mxu0 0.0
      %419 = vmatpush2.xpose.msra.mxu0 0.0
      %420 = vmatprep.subr.mxu0 0.0
      %421 = vmatpush2.xpose.msra.mxu0 0.0
      %422 = vmatprep.subr.mxu0 0.0
      %423 = vmatpush2.xpose.msra.mxu0 0.0
      %424 = vmatprep.subr.mxu0 0.0
      %425 = vmatpush2.xpose.msra.mxu0 0.0
      %426 = vmatprep.subr.mxu0 0.0
      %427 = vmatpush2.xpose.msra.mxu0 0.0
      %428 = vmatprep.subr.mxu0 0.0
      %429 = vmatpush2.xpose.msra.mxu0 0.0
      %430 = vmatprep.subr.mxu0 0.0
      %431 = vmatpush2.xpose.msra.mxu0 0.0
      %432 = vmatprep.subr.mxu0 0.0
      %433 = vmatpush2.xpose.msra.mxu0 0.0
      %434 = vmatprep.subr.mxu0 0.0
      %435 = vmatpush2.xpose.msra.mxu0 0.0
      %436 = vmatprep.subr.mxu0 0.0
      %437 = vmatpush2.xpose.msra.mxu0 0.0
      %438 = vmatprep.mubr.f32.mxu0 %v371
      %439 = vmatmul.mubr.f32.gmra.mxu0 %v367
      %v440 = vpop.f32.mrf.mxu0
      %v441 = vadd.f32 0.0, %v440
      %v442 = vpop.f32.mrf.mxu0
      %443 = vdwg.mxu0
      %v444 = vxor.u32 %v356, 2147483648
      %v445 = vxor.u32 %v357, 2147483648
      %v446 = vxor.u32 %v358, 2147483648
      %v447 = vxor.u32 %v359, 2147483648
      %v448 = vmul.f32 %v444, 1.442695
      %v449 = vpow.pop %v448
      %v450 = vmul.f32 %v445, 1.442695
      %v451 = vpow.pop %v450
      %v452 = vmul.f32 %v446, 1.442695
      %v453 = vpow.pop %v452
      %v454 = vmul.f32 %v447, 1.442695
      %v455 = vpow.pop %v454
      %v456 = vadd.f32 %v449, 1.0
      %v457 = vadd.f32 %v451, 1.0
      %v458 = vadd.f32 %v453, 1.0
      %v459 = vadd.f32 %v455, 1.0
      %v460 = vrcp.pop %v456
      %v461 = vmul.f32 1.0, %v460
      %v462 = vrcp.pop %v457
      %v463 = vmul.f32 1.0, %v462
      %v464 = vrcp.pop %v458
      %v465 = vmul.f32 1.0, %v464
      %v466 = vrcp.pop %v459
      %v467 = vmul.f32 1.0, %v466
      %v468 = vmul.f32 %v465, 0.5
      %v469 = vsub.f32 %v461, %v468
      %v470 = vmul.f32 %v469, 16.0
      %v471 = vmul.f32 %v467, 0.5
      %v472 = vsub.f32 %v463, %v471
      %v473 = vmul.f32 %v472, 16.0
      %v474 = vadd.f32 %v461, %v468
      %v475 = vmul.f32 %v474, 16.0
      %v476 = vadd.f32 %v463, %v471
      %v477 = vmul.f32 %v476, 16.0
      %v478 = vxor.u32 %v360, 2147483648
      %v479 = vmul.f32 %v478, 1.442695
      %v480 = vpow.pop %v479
      %v481 = vadd.f32 %v480, 1.0
      %v482 = vrcp.pop %v481
      %v483 = vmul.f32 1.0, %v482
      %vm484 = vcmp.gt.f32.partialorder %v483, 0.1
      %v485 = vld [vmem:[%s2] ss:$4 sm:$0x3]
      %s486 = scalar_lea.vmem %s2, 1
      %v487 = vld [vmem:[%s486] ss:$4 sm:$0x3]
      %v489 = vlaneseq
      %v490 = vshrl.u32 %v489, 7
      %v491 = vsub.s32 0, %v490
      %v492 = vrot.slane %v485, %v491
      %v493 = vlaneseq
      %v494 = vshrl.u32 %v493, 7
      %v495 = vsub.s32 1, %v494
      %v496 = vrot.slane %v485, %v495
      %vm499 = vcmp.ge.f32.partialorder %v492, %v470
      %vm500 = vcmp.ge.f32.partialorder %v496, %v470
      %vm501 = vcmp.le.f32.partialorder %v492, %v475
      %vm502 = vcmp.le.f32.partialorder %v496, %v475
      %vm503 = vmand %vm499, %vm501
      %vm504 = vmand %vm500, %vm502
      %v506 = vlaneseq
      %v507 = vshrl.u32 %v506, 7
      %v508 = vsub.s32 0, %v507
      %v509 = vrot.slane %v487, %v508
      %v510 = vlaneseq
      %v511 = vshrl.u32 %v510, 7
      %v512 = vsub.s32 1, %v511
      %v513 = vrot.slane %v487, %v512
      %vm516 = vcmp.ge.f32.partialorder %v509, %v473
      %vm517 = vcmp.ge.f32.partialorder %v513, %v473
      %vm518 = vmand %vm503, %vm516
      %vm519 = vmand %vm504, %vm517
      %vm520 = vcmp.le.f32.partialorder %v509, %v477
      %vm521 = vcmp.le.f32.partialorder %v513, %v477
      %vm522 = vmand %vm518, %vm520
      %vm523 = vmand %vm519, %vm521
      %vm524 = vcmp.gt.f32.partialorder %v336, 0.0
      %vm525 = vcmp.gt.f32.partialorder %v338, 0.0
      %vm526 = vmand %vm522, %vm524
      %vm527 = vmand %vm523, %vm525
      %v528 = vsel %vm484, 1, 0
      %vm529 = vcmp.eq.s32.totalorder %v528, 1
      %vm530 = vmand %vm526, %vm529
      %vm531 = vmand %vm527, %vm529
      %v532 = vsel %vm530, 1, 0
      %v533 = vsel %vm531, 1, 0
      %v534 = vcvt.s32.f32 %v532
      %v535 = vcvt.s32.f32 %v533
      %v536 = vadd.f32 %v534, %v535
      %537 = vadd.xlane.f32.xlu0 %v536
      %v538 = vpop.xlane.xlu0 %537
      %vm539 = vcmp.ge.f32.partialorder %v538, 4.0
      %v540 = vsel %vm539, 1, 0
      %v541 = vcvt.s32.f32 %v540
      %v542 = vmul.f32 %v534, %v541
      %v543 = vmul.f32 %v535, %v541
      %v544 = vrot.slane %v542, 4
      %v545 = vmax.f32 %v542, %v544
      %v546 = vrot.slane %v545, 2
      %v547 = vmax.f32 %v545, %v546
      %v548 = vrot.slane %v547, 1
      %v549 = vmax.f32 %v547, %v548
      %v550 = vrot.slane %v543, 4
      %v551 = vmax.f32 %v543, %v550
      %v552 = vrot.slane %v551, 2
      %v553 = vmax.f32 %v551, %v552
      %v554 = vrot.slane %v553, 1
      %v555 = vmax.f32 %v553, %v554
      %v558 = vcombine.low %v549, %v555
      %v560 = vunpack.c.l.s4 1966171168
      %v561 = vunpack.c.0.s8 %v560
      %v562 = vlaneseq
      %v563 = vshrl.u32 %v562, 7
      %v564 = vsub.s32 %v561, %v563
      %v565 = vrot.slane %v558, %v564
      %v567 = vunpack.c.l.s4 1966171168
      %v568 = vunpack.c.0.s8 %v567
      %v569 = vlaneseq
      %v570 = vshrl.u32 %v569, 7
      %v571 = vsub.s32 %v568, %v570
      %v572 = vrot.slane %v565, %v571
      %v574 = vlaneseq
      %vm575 = vcmp.ge.s32.totalorder %v574, 0
      %vm576 = vcmp.lt.s32.totalorder %v574, 256
      %vm577 = vmand %vm575, %vm576
      %578 = vst.msk [vmem:[%s201] sm:$0x3] %vm577, %v572
      %v579 = vxor.u32 %v441, 2147483648
      %v580 = vmul.f32 %v579, 1.442695
      %v581 = vpow.pop %v580
      %v582 = vadd.f32 %v581, 1.0
      %v583 = vrcp.pop %v582
      %v584 = vmul.f32 1.0, %v583
      %v585 = vmul.f32 %v584, 0.5
      %587 = vrot.lane.b32.xlu0 %v585, 112
      %v588 = vpop.permute.xlu0 %587
      %v590 = vsub.f32 %v584, %v588
      %v591 = vmul.f32 %v590, 16.0
      %v592 = vadd.f32 %v584, %v588
      %v593 = vmul.f32 %v592, 16.0
      %595 = vrot.lane.b32.xlu0 %v593, 16
      %v596 = vpop.permute.xlu0 %595
      %vm598 = vcmask 130048
      %v599 = vsel %vm598, %v591, %v596
      %vm600 = vcmask 195584
      %v601 = vsel %vm600, %v599, %v596
      %vm602 = vcmask 261120
      %v603 = vsel %vm602, %v601, %v584
      %vm604 = vcmask 326656
      %v605 = vsel %vm604, %v603, 0.0
      %606 = vst [vmem:[%s204] sm:$0x1] %v605
      %p607 = scmp.lt.s32.totalorder %s16, 1
      %s608 = scalar_select %p607, %s16, 1
      %s609 = smul.addr %s608, 2
      %s610 = scalar_lea.vmem %s3, %s609
      %p611 = scmp.lt.s32.totalorder %s16, 1
      %s612 = scalar_select %p611, %s16, 1
      %s613 = scalar_lea.vmem %s4, %s612
      // Predicated region
      $region33: #{gsamnet_forward.1} parent=31 // pred_check
        %p614 = pneg %p102
      $region34: #{gsamnet_forward.1} parent=31 // pred_check_branch
        %616 = sbr.rel (%p614) target = $region36
      $region35: #{gsamnet_forward.1} parent=31 // pred_region
        _
      $region36: #{gsamnet_forward.1} parent=31 // pred_fallthru
        _
      // Predicated region
      $region37: #{gsamnet_forward.1} parent=31 // pred_check
        %p617 = pneg %p128
      $region38: #{gsamnet_forward.1} parent=31 // pred_check_branch
        %619 = sbr.rel (%p617) target = $region40
      $region39: #{gsamnet_forward.1} parent=31 // pred_region
        _
      $region40: #{gsamnet_forward.1} parent=31 // pred_fallthru
        _
    $region32: #{gsamnet_forward.1} parent=5 // pred_fallthru
      _
    %p620 = scmp.le.s32.totalorder 2, %s11
    // Predicated region
    $region41: #{gsamnet_forward.1} parent=5 // pred_check
      %p621 = pneg %p620
    $region42: #{gsamnet_forward.1} parent=5 // pred_check_branch
      %623 = sbr.rel (%p621) target = $region44
    $region43: #{gsamnet_forward.1} parent=5 // pred_region
      %s624 = ssub.s32 %s11, 2
      // Predicated region
      $region45: #{gsamnet_forward.1} parent=43 // pred_check
        %p625 = pneg %p108
      $region46: #{gsamnet_forward.1} parent=43 // pred_check_branch
        %627 = sbr.rel (%p625) target = $region48
      $region47: #{gsamnet_forward.1} parent=43 // pred_region
        %p628 = scmp.lt.s32.totalorder %s17, 1
        %s629 = scalar_select %p628, %s17, 1
        %s630 = smul.addr %s629, 2
        %s631 = scalar_lea.vmem %s3, %s630
      $region48: #{gsamnet_forward.1} parent=43 // pred_fallthru
        _
      // Predicated region
      $region49: #{gsamnet_forward.1} parent=43 // pred_check
        %p632 = pneg %p134
      $region50: #{gsamnet_forward.1} parent=43 // pred_check_branch
        %634 = sbr.rel (%p632) target = $region52
      $region51: #{gsamnet_forward.1} parent=43 // pred_region
        %p635 = scmp.lt.s32.totalorder %s17, 1
        %s636 = scalar_select %p635, %s17, 1
        %s637 = scalar_lea.vmem %s4, %s636
      $region52: #{gsamnet_forward.1} parent=43 // pred_fallthru
        _
    $region44: #{gsamnet_forward.1} parent=5 // pred_fallthru
      _
  $region6: #{gsamnet_forward.1} parent=0 // loop_footer
    %s15 = sadd.s32 1, %s11
  $region7: #{gsamnet_forward.1} parent=0 // loop_footer_branch
    %10 = sbr.rel target = $region3
  $region8: #{gsamnet_forward.1} parent=0 // loop_exit
    _

</llo_original>
